<compile_context>
chip_gen: v5e
topology: v5e:2x2
jax: 0.10.0
libtpu: 0.0.40
codegen_flags: <defaults>
</compile_context>

<pallas_src>
import functools

import jax
import jax.numpy as jnp
from jax.experimental import pallas as pl
from jax.experimental.pallas import tpu as pltpu


# --------------------------------------------------------------------------- #
# Kernel
# --------------------------------------------------------------------------- #
def _autoencoder_kernel(x_ref,
                        w1_ref, b1_ref,      # enc1: Linear(input_dim -> intermediate_dim)
                        w23_ref, b23_ref,    # fused enc2 @ dec1 (intermediate -> intermediate)
                        w4_ref, b4_ref,      # dec2: Linear(intermediate_dim -> input_dim)
                        out_ref):
    mxu_dtype = w1_ref.dtype
    x = x_ref[...].astype(mxu_dtype)         # no-op if x is already bf16

    # Linear -> Dropout(identity) -> ReLU   (bias add / ReLU in f32)
    h = jnp.dot(x, w1_ref[...], preferred_element_type=jnp.float32) + b1_ref[...]
    h = jnp.maximum(h, 0.0)

    # fused (Linear -> Dropout(identity)) @ Linear -> ReLU
    d = jnp.dot(h.astype(mxu_dtype), w23_ref[...],
                preferred_element_type=jnp.float32) + b23_ref[...]
    d = jnp.maximum(d, 0.0)

    # final Linear back to input_dim
    y = jnp.dot(d.astype(mxu_dtype), w4_ref[...],
                preferred_element_type=jnp.float32) + b4_ref[...]

    out_ref[...] = y.astype(out_ref.dtype)


# --------------------------------------------------------------------------- #
# One-time parameter preparation (hoisted out of the per-call path)
# --------------------------------------------------------------------------- #
def fuse_autoencoder_params(params, *, mxu_dtype=jnp.bfloat16):
    """Exact host-side fusion of enc2@dec1 plus MXU-dtype casts.

    Do this ONCE per parameter set (not per forward call).  Weights are stored
    as [in, out] (torch weight.T), biases as [1, out].
    """
    f32 = jnp.float32
    w1, b1 = params["enc1"]
    w2, b2 = params["enc2"]
    w3, b3 = params["dec1"]
    w4, b4 = params["dec2"]

    # No nonlinearity (dropout is identity in eval) between enc2 and dec1, so
    # z@W3 + b3 with z = h@W2 + b2  ==  h@(W2@W3) + (b2@W3 + b3).  Exact math.
    w23 = jnp.dot(w2.astype(f32), w3.astype(f32))                  # [D_mid, D_mid]
    b23 = jnp.dot(b2.astype(f32), w3.astype(f32)) + b3.astype(f32)

    return (w1.astype(mxu_dtype), b1.astype(f32),
            w23.astype(mxu_dtype), b23.astype(f32),
            w4.astype(mxu_dtype), b4.astype(f32))


# --------------------------------------------------------------------------- #
# Forward wrapper
# --------------------------------------------------------------------------- #
def _pick_batch_tile(B):
    if B <= 128:
        return 128                       # one padded 128-row tile
    if B <= 256:
        return 128                       # grid=2 -> both v7x TCs get work
    # >= ~6 grid steps (>= 3 per v7x TensorCore) so pipelining reaches steady
    # state; rows are multiples of 128; cap at 1024 rows (~3 MiB f32 in+out,
    # comfortably inside default scoped VMEM even when double-buffered).
    tile = 128 * pl.cdiv(pl.cdiv(B, 6), 128)
    return int(max(128, min(1024, tile)))


@functools.partial(jax.jit, static_argnames=("batch_tile", "out_dtype"))
def simple_autoencoder_forward(x, fused_params, *, batch_tile=None,
                               out_dtype=None):
    """x: [B, input_dim] (f32 or bf16). fused_params: output of
    fuse_autoencoder_params().  Returns [B, input_dim] in out_dtype (default:
    x.dtype)."""
    w1c, b1c, w23c, b23c, w4c, b4c = fused_params
    B, D_in = x.shape
    D_mid = w1c.shape[1]
    out_dtype = x.dtype if out_dtype is None else out_dtype

    if batch_tile is None:
        batch_tile = _pick_batch_tile(B)

    grid_b = pl.cdiv(B, batch_tile)
    b_pad = grid_b * batch_tile
    x_in = x if b_pad == B else jnp.pad(x, ((0, b_pad - B), (0, 0)))

    def full_spec(shape):
        # whole (small, constant-index) parameter array kept resident in VMEM
        return pl.BlockSpec(shape, lambda i, _n=len(shape): (0,) * _n)

    # ---- advisory cost estimate (includes padded tail rows; advisory only) --
    flops = 2 * b_pad * (D_in * D_mid + D_mid * D_mid + D_mid * D_in)
    io_bytes = (b_pad * D_in * jnp.dtype(x.dtype).itemsize
                + b_pad * D_in * jnp.dtype(out_dtype).itemsize)
    param_bytes = sum(int(a.size) * a.dtype.itemsize
                      for a in (w1c, b1c, w23c, b23c, w4c, b4c))
    cost = pl.CostEstimate(flops=int(flops), transcendentals=0,
                           bytes_accessed=int(io_bytes + param_bytes))

    out = pl.pallas_call(
        _autoencoder_kernel,
        out_shape=jax.ShapeDtypeStruct((b_pad, D_in), out_dtype),
        grid_spec=pltpu.PrefetchScalarGridSpec(
            num_scalar_prefetch=0,
            grid=(grid_b,),
            in_specs=[
                pl.BlockSpec((batch_tile, D_in), lambda i: (i, 0)),
                full_spec(w1c.shape), full_spec(b1c.shape),
                full_spec(w23c.shape), full_spec(b23c.shape),
                full_spec(w4c.shape), full_spec(b4c.shape),
            ],
            out_specs=pl.BlockSpec((batch_tile, D_in), lambda i: (i, 0)),
        ),
        compiler_params=pltpu.CompilerParams(
            dimension_semantics=("parallel",)),
        cost_estimate=cost,
    )(x_in, w1c, b1c, w23c, b23c, w4c, b4c)

    return out if b_pad == B else out[:B]


# --------------------------------------------------------------------------- #
# Deterministic init + pure-JAX reference
# --------------------------------------------------------------------------- #
def init_params(key, input_dim=384, intermediate_dim=64, latent_dim=10):
    """Synthetic init matching nn.Linear shapes; weights stored [in, out]."""
    def linear(k, fan_in, fan_out):
        kw, kb = jax.random.split(k)
        bound = 1.0 / jnp.sqrt(float(fan_in))
        w = jax.random.uniform(kw, (fan_in, fan_out), jnp.float32, -bound, bound)
        b = jax.random.uniform(kb, (1, fan_out), jnp.float32, -bound, bound)
        return w, b

    k1, k2, k3, k4 = jax.random.split(key, 4)
    return {
        "enc1": linear(k1, input_dim, intermediate_dim),
        "enc2": linear(k2, intermediate_dim, latent_dim),
        "dec1": linear(k3, latent_dim, intermediate_dim),
        "dec2": linear(k4, intermediate_dim, input_dim),
    }


def _reference_forward(x, params):
    w1, b1 = params["enc1"]
    w2, b2 = params["enc2"]
    w3, b3 = params["dec1"]
    w4, b4 = params["dec2"]
    h = jnp.maximum(x @ w1 + b1, 0.0)          # Dropout = identity (eval)
    z = h @ w2 + b2                            # Dropout = identity (eval)
    d = jnp.maximum(z @ w3 + b3, 0.0)
    return d @ w4 + b4


# --------------------------------------------------------------------------- #
# Demo / correctness check
# --------------------------------------------------------------------------- #
if __name__ == "__main__":
    key = jax.random.PRNGKey(0)
    k_param, k_x1, k_x2 = jax.random.split(key, 3)

    input_dim, intermediate_dim, latent_dim = 384, 64, 10
    params = init_params(k_param, input_dim, intermediate_dim, latent_dim)

    # Hoisted once: fused/cast weights (not in the per-call path).
    fused = fuse_autoencoder_params(params)
    fused = jax.tree_util.tree_map(jax.block_until_ready, fused)

    # Small batch (single padded 128-row tile, grid=1).
    x_small = jax.random.normal(k_x1, (8, input_dim), jnp.float32)
    out_small = jax.block_until_ready(simple_autoencoder_forward(x_small, fused))
    ref_small = _reference_forward(x_small, params)
    assert out_small.shape == x_small.shape, out_small.shape
    # bf16 MXU operands (f32 accumulation) + pre-fused W23 round at <~1%.
    assert jnp.allclose(out_small, ref_small, atol=5e-2, rtol=5e-2), \
        "mismatch vs reference (small batch)"

    # Ragged batch exercising the tiling path (tile=128, grid=3, padded tail).
    x_big = jax.random.normal(k_x2, (300, input_dim), jnp.float32)
    out_big = jax.block_until_ready(simple_autoencoder_forward(x_big, fused))
    ref_big = _reference_forward(x_big, params)
    assert out_big.shape == x_big.shape, out_big.shape
    assert jnp.allclose(out_big, ref_big, atol=5e-2, rtol=5e-2), \
        "mismatch vs reference (tiled batch)"

    print("KERNEL_OK")
</pallas_src>

<mosaic_0001>
module attributes {stable_mosaic.version = 11 : i64} {
  func.func @_autoencoder_kernel(%arg0: i32, %arg1: memref<128x384xf32, #tpu.memory_space<vmem>>, %arg2: memref<384x64xbf16, #tpu.memory_space<vmem>>, %arg3: memref<1x64xf32, #tpu.memory_space<vmem>>, %arg4: memref<64x64xbf16, #tpu.memory_space<vmem>>, %arg5: memref<1x64xf32, #tpu.memory_space<vmem>>, %arg6: memref<64x384xbf16, #tpu.memory_space<vmem>>, %arg7: memref<1x384xf32, #tpu.memory_space<vmem>>, %arg8: memref<128x384xf32, #tpu.memory_space<vmem>>) attributes {dimension_semantics = [#tpu.dimension_semantics<parallel>], iteration_bounds = array<i64: 1>, scalar_prefetch = 0 : i64, scratch_operands = 0 : i64, tpu.core_type = #tpu.core_type<tc>, window_params = [{transform_indices = @transform_0, window_bounds = array<i64: 128, 384>}, {pipeline_mode = #tpu.pipeline_mode<synchronous>, transform_indices = @transform_1, window_bounds = array<i64: 384, 64>}, {pipeline_mode = #tpu.pipeline_mode<synchronous>, transform_indices = @transform_2, window_bounds = array<i64: 1, 64>}, {pipeline_mode = #tpu.pipeline_mode<synchronous>, transform_indices = @transform_3, window_bounds = array<i64: 64, 64>}, {pipeline_mode = #tpu.pipeline_mode<synchronous>, transform_indices = @transform_4, window_bounds = array<i64: 1, 64>}, {pipeline_mode = #tpu.pipeline_mode<synchronous>, transform_indices = @transform_5, window_bounds = array<i64: 64, 384>}, {pipeline_mode = #tpu.pipeline_mode<synchronous>, transform_indices = @transform_6, window_bounds = array<i64: 1, 384>}, {transform_indices = @transform_7, window_bounds = array<i64: 128, 384>}]} {
    %c0 = arith.constant 0 : index
    %c0_0 = arith.constant 0 : index
    %0 = vector.load %arg1[%c0, %c0_0] : memref<128x384xf32, #tpu.memory_space<vmem>>, vector<128x384xf32>
    %1 = arith.truncf %0 : vector<128x384xf32> to vector<128x384xbf16>
    %c0_1 = arith.constant 0 : index
    %c0_2 = arith.constant 0 : index
    %2 = vector.load %arg2[%c0_1, %c0_2] : memref<384x64xbf16, #tpu.memory_space<vmem>>, vector<384x64xbf16>
    %cst = arith.constant dense<0.000000e+00> : vector<128x64xf32>
    %3 = tpu.matmul %1, %2, %cst {dimension_numbers = #tpu.dot_dimension_numbers<[1], [0], [0], [1], [0, 0, 1, 1], [], []>} : vector<128x384xbf16>, vector<384x64xbf16>, vector<128x64xf32> -> vector<128x64xf32>
    %c0_3 = arith.constant 0 : index
    %c0_4 = arith.constant 0 : index
    %4 = vector.load %arg3[%c0_3, %c0_4] : memref<1x64xf32, #tpu.memory_space<vmem>>, vector<1x64xf32>
    %5 = vector.broadcast %4 : vector<1x64xf32> to vector<128x64xf32>
    %6 = arith.addf %3, %5 : vector<128x64xf32>
    %cst_5 = arith.constant 0.000000e+00 : f32
    %7 = vector.broadcast %cst_5 : f32 to vector<128x64xf32>
    %8 = arith.maximumf %6, %7 : vector<128x64xf32>
    %9 = arith.truncf %8 : vector<128x64xf32> to vector<128x64xbf16>
    %c0_6 = arith.constant 0 : index
    %c0_7 = arith.constant 0 : index
    %10 = vector.load %arg4[%c0_6, %c0_7] : memref<64x64xbf16, #tpu.memory_space<vmem>>, vector<64x64xbf16>
    %cst_8 = arith.constant dense<0.000000e+00> : vector<128x64xf32>
    %11 = tpu.matmul %9, %10, %cst_8 {dimension_numbers = #tpu.dot_dimension_numbers<[1], [0], [0], [1], [0, 0, 1, 1], [], []>} : vector<128x64xbf16>, vector<64x64xbf16>, vector<128x64xf32> -> vector<128x64xf32>
    %c0_9 = arith.constant 0 : index
    %c0_10 = arith.constant 0 : index
    %12 = vector.load %arg5[%c0_9, %c0_10] : memref<1x64xf32, #tpu.memory_space<vmem>>, vector<1x64xf32>
    %13 = vector.broadcast %12 : vector<1x64xf32> to vector<128x64xf32>
    %14 = arith.addf %11, %13 : vector<128x64xf32>
    %cst_11 = arith.constant 0.000000e+00 : f32
    %15 = vector.broadcast %cst_11 : f32 to vector<128x64xf32>
    %16 = arith.maximumf %14, %15 : vector<128x64xf32>
    %17 = arith.truncf %16 : vector<128x64xf32> to vector<128x64xbf16>
    %c0_12 = arith.constant 0 : index
    %c0_13 = arith.constant 0 : index
    %18 = vector.load %arg6[%c0_12, %c0_13] : memref<64x384xbf16, #tpu.memory_space<vmem>>, vector<64x384xbf16>
    %cst_14 = arith.constant dense<0.000000e+00> : vector<128x384xf32>
    %19 = tpu.matmul %17, %18, %cst_14 {dimension_numbers = #tpu.dot_dimension_numbers<[1], [0], [0], [1], [0, 0, 1, 1], [], []>} : vector<128x64xbf16>, vector<64x384xbf16>, vector<128x384xf32> -> vector<128x384xf32>
    %c0_15 = arith.constant 0 : index
    %c0_16 = arith.constant 0 : index
    %20 = vector.load %arg7[%c0_15, %c0_16] : memref<1x384xf32, #tpu.memory_space<vmem>>, vector<1x384xf32>
    %21 = vector.broadcast %20 : vector<1x384xf32> to vector<128x384xf32>
    %22 = arith.addf %19, %21 : vector<128x384xf32>
    %c0_17 = arith.constant 0 : index
    %c0_18 = arith.constant 0 : index
    %23 = vector.load %arg8[%c0_17, %c0_18] : memref<128x384xf32, #tpu.memory_space<vmem>>, vector<128x384xf32>
    tpu.vector_store %arg8[%c0_17, %c0_18], %22 {strides = array<i32>} : memref<128x384xf32, #tpu.memory_space<vmem>>, vector<128x384xf32>,
    return
  }
  func.func @transform_0(%arg0: i32) -> (i32, i32) {
    %c0_i32 = arith.constant 0 : i32
    %c0_i32_0 = arith.constant 0 : i32
    return %arg0, %c0_i32 : i32, i32
  }
  func.func @transform_1(%arg0: i32) -> (i32, i32) {
    %c0_i32 = arith.constant 0 : i32
    %c0_i32_0 = arith.constant 0 : i32
    %c0_i32_1 = arith.constant 0 : i32
    return %c0_i32, %c0_i32_0 : i32, i32
  }
  func.func @transform_2(%arg0: i32) -> (i32, i32) {
    %c0_i32 = arith.constant 0 : i32
    %c0_i32_0 = arith.constant 0 : i32
    %c0_i32_1 = arith.constant 0 : i32
    return %c0_i32, %c0_i32_0 : i32, i32
  }
  func.func @transform_3(%arg0: i32) -> (i32, i32) {
    %c0_i32 = arith.constant 0 : i32
    %c0_i32_0 = arith.constant 0 : i32
    %c0_i32_1 = arith.constant 0 : i32
    return %c0_i32, %c0_i32_0 : i32, i32
  }
  func.func @transform_4(%arg0: i32) -> (i32, i32) {
    %c0_i32 = arith.constant 0 : i32
    %c0_i32_0 = arith.constant 0 : i32
    %c0_i32_1 = arith.constant 0 : i32
    return %c0_i32, %c0_i32_0 : i32, i32
  }
  func.func @transform_5(%arg0: i32) -> (i32, i32) {
    %c0_i32 = arith.constant 0 : i32
    %c0_i32_0 = arith.constant 0 : i32
    %c0_i32_1 = arith.constant 0 : i32
    return %c0_i32, %c0_i32_0 : i32, i32
  }
  func.func @transform_6(%arg0: i32) -> (i32, i32) {
    %c0_i32 = arith.constant 0 : i32
    %c0_i32_0 = arith.constant 0 : i32
    %c0_i32_1 = arith.constant 0 : i32
    return %c0_i32, %c0_i32_0 : i32, i32
  }
  func.func @transform_7(%arg0: i32) -> (i32, i32) {
    %c0_i32 = arith.constant 0 : i32
    %c0_i32_0 = arith.constant 0 : i32
    return %arg0, %c0_i32 : i32, i32
  }
}

</mosaic_0001>

<llo_original>
// kernel: simple_autoencoder_forward.1
$region0: #{simple_autoencoder_forward.1}
  #allocation0 [shape = 'u32[]', space=smem, size = 0x4, offset = 0x4, fixed_abs, tag = 'smem constant byte address 0x4 - core index']
  #allocation1 [shape = 'u32[72,128]{1,0:T(1,128)}', space=vmem, size = 0x9000, scoped, tag = 'internal scratch']
  %s0 = inlined_call_operand.vmem [shape: f32[128,384], index: 0, kind: input, shape index: {}]
  %s1 = inlined_call_operand.vmem [shape: bf16[384,64], index: 1, kind: input, shape index: {}]
  %s2 = inlined_call_operand.vmem [shape: f32[1,64], index: 2, kind: input, shape index: {}]
  %s3 = inlined_call_operand.vmem [shape: bf16[64,64], index: 3, kind: input, shape index: {}]
  %s4 = inlined_call_operand.vmem [shape: f32[1,64], index: 4, kind: input, shape index: {}]
  %s5 = inlined_call_operand.vmem [shape: bf16[64,384], index: 5, kind: input, shape index: {}]
  %s6 = inlined_call_operand.vmem [shape: f32[1,384], index: 6, kind: input, shape index: {}]
  %s7 = inlined_call_operand.vmem [shape: f32[128,384], index: 7, kind: output, shape index: {}]
  %s8 = sld [smem:[#allocation0]]
  $region38: #{simple_autoencoder_forward.1} parent=0
    _
  %s10 = ssub.s32 1, %s8
  %s11 = scalar_select 0, %s10, %s8
  // Predicated region
  $region2: #{simple_autoencoder_forward.1} parent=0 // pred_check
    _
  $region3: #{simple_autoencoder_forward.1} parent=0 // pred_check_branch
    %13 = sbr.rel (0) target = $region5
  $region4: #{simple_autoencoder_forward.1} parent=0 // pred_region
    _
  $region5: #{simple_autoencoder_forward.1} parent=0 // pred_fallthru
    _
  // Predicated region
  $region6: #{simple_autoencoder_forward.1} parent=0 // pred_check
    _
  $region7: #{simple_autoencoder_forward.1} parent=0 // pred_check_branch
    %15 = sbr.rel (0) target = $region9
  $region8: #{simple_autoencoder_forward.1} parent=0 // pred_region
    _
  $region9: #{simple_autoencoder_forward.1} parent=0 // pred_fallthru
    _
  // Predicated region
  $region10: #{simple_autoencoder_forward.1} parent=0 // pred_check
    _
  $region11: #{simple_autoencoder_forward.1} parent=0 // pred_check_branch
    %17 = sbr.rel (0) target = $region13
  $region12: #{simple_autoencoder_forward.1} parent=0 // pred_region
    _
  $region13: #{simple_autoencoder_forward.1} parent=0 // pred_fallthru
    _
  // Predicated region
  $region14: #{simple_autoencoder_forward.1} parent=0 // pred_check
    _
  $region15: #{simple_autoencoder_forward.1} parent=0 // pred_check_branch
    %19 = sbr.rel (0) target = $region17
  $region16: #{simple_autoencoder_forward.1} parent=0 // pred_region
    _
  $region17: #{simple_autoencoder_forward.1} parent=0 // pred_fallthru
    _
  // Predicated region
  $region18: #{simple_autoencoder_forward.1} parent=0 // pred_check
    _
  $region19: #{simple_autoencoder_forward.1} parent=0 // pred_check_branch
    %21 = sbr.rel (0) target = $region21
  $region20: #{simple_autoencoder_forward.1} parent=0 // pred_region
    _
  $region21: #{simple_autoencoder_forward.1} parent=0 // pred_fallthru
    _
  // Predicated region
  $region22: #{simple_autoencoder_forward.1} parent=0 // pred_check
    _
  $region23: #{simple_autoencoder_forward.1} parent=0 // pred_check_branch
    %23 = sbr.rel (0) target = $region25
  $region24: #{simple_autoencoder_forward.1} parent=0 // pred_region
    _
  $region25: #{simple_autoencoder_forward.1} parent=0 // pred_fallthru
    _
  // Predicated region
  $region26: #{simple_autoencoder_forward.1} parent=0 // pred_check
    _
  $region27: #{simple_autoencoder_forward.1} parent=0 // pred_check_branch
    %25 = sbr.rel (0) target = $region29
  $region28: #{simple_autoencoder_forward.1} parent=0 // pred_region
    _
  $region29: #{simple_autoencoder_forward.1} parent=0 // pred_fallthru
    _
  %v27 = vld [vmem:[%s0] sm:$0xff]
  %v28 = vld [vmem:[%s0 + $0x8] sm:$0xff]
  %v29 = vld [vmem:[%s0 + $0x10] sm:$0xff]
  %v30 = vld [vmem:[%s0 + $0x18] sm:$0xff]
  %v31 = vld [vmem:[%s0 + $0x20] sm:$0xff]
  %v32 = vld [vmem:[%s0 + $0x28] sm:$0xff]
  %v33 = vld [vmem:[%s0 + $0x30] sm:$0xff]
  %v34 = vld [vmem:[%s0 + $0x38] sm:$0xff]
  %v35 = vld [vmem:[%s0 + $0x40] sm:$0xff]
  %v36 = vld [vmem:[%s0 + $0x48] sm:$0xff]
  %v37 = vld [vmem:[%s0 + $0x50] sm:$0xff]
  %v38 = vld [vmem:[%s0 + $0x58] sm:$0xff]
  %v39 = vld [vmem:[%s0 + $0x60] sm:$0xff]
  %v40 = vld [vmem:[%s0 + $0x68] sm:$0xff]
  %v41 = vld [vmem:[%s0 + $0x70] sm:$0xff]
  %v42 = vld [vmem:[%s0 + $0x78] sm:$0xff]
  %v43 = vld [vmem:[%s0 + $0x80] sm:$0xff]
  %v44 = vld [vmem:[%s0 + $0x88] sm:$0xff]
  %v45 = vld [vmem:[%s0 + $0x90] sm:$0xff]
  %v46 = vld [vmem:[%s0 + $0x98] sm:$0xff]
  %v47 = vld [vmem:[%s0 + $0xa0] sm:$0xff]
  %v48 = vld [vmem:[%s0 + $0xa8] sm:$0xff]
  %v49 = vld [vmem:[%s0 + $0xb0] sm:$0xff]
  %v50 = vld [vmem:[%s0 + $0xb8] sm:$0xff]
  %v51 = vld [vmem:[%s0 + $0xc0] sm:$0xff]
  %v52 = vld [vmem:[%s0 + $0xc8] sm:$0xff]
  %v53 = vld [vmem:[%s0 + $0xd0] sm:$0xff]
  %v54 = vld [vmem:[%s0 + $0xd8] sm:$0xff]
  %v55 = vld [vmem:[%s0 + $0xe0] sm:$0xff]
  %v56 = vld [vmem:[%s0 + $0xe8] sm:$0xff]
  %v57 = vld [vmem:[%s0 + $0xf0] sm:$0xff]
  %v58 = vld [vmem:[%s0 + $0xf8] sm:$0xff]
  %v59 = vld [vmem:[%s0 + $0x100] sm:$0xff]
  %v60 = vld [vmem:[%s0 + $0x108] sm:$0xff]
  %v61 = vld [vmem:[%s0 + $0x110] sm:$0xff]
  %v62 = vld [vmem:[%s0 + $0x118] sm:$0xff]
  %v63 = vld [vmem:[%s0 + $0x120] sm:$0xff]
  %v64 = vld [vmem:[%s0 + $0x128] sm:$0xff]
  %v65 = vld [vmem:[%s0 + $0x130] sm:$0xff]
  %v66 = vld [vmem:[%s0 + $0x138] sm:$0xff]
  %v67 = vld [vmem:[%s0 + $0x140] sm:$0xff]
  %v68 = vld [vmem:[%s0 + $0x148] sm:$0xff]
  %v69 = vld [vmem:[%s0 + $0x150] sm:$0xff]
  %v70 = vld [vmem:[%s0 + $0x158] sm:$0xff]
  %v71 = vld [vmem:[%s0 + $0x160] sm:$0xff]
  %v72 = vld [vmem:[%s0 + $0x168] sm:$0xff]
  %v73 = vld [vmem:[%s0 + $0x170] sm:$0xff]
  %v74 = vld [vmem:[%s0 + $0x178] sm:$0xff]
  %v75 = vpack.c.bf16 %v30, %v27
  %v76 = vpack.c.bf16 %v31, %v28
  %v77 = vpack.c.bf16 %v32, %v29
  %v78 = vpack.c.bf16 %v36, %v33
  %v79 = vpack.c.bf16 %v37, %v34
  %v80 = vpack.c.bf16 %v38, %v35
  %v81 = vpack.c.bf16 %v42, %v39
  %v82 = vpack.c.bf16 %v43, %v40
  %v83 = vpack.c.bf16 %v44, %v41
  %v84 = vpack.c.bf16 %v48, %v45
  %v85 = vpack.c.bf16 %v49, %v46
  %v86 = vpack.c.bf16 %v50, %v47
  %v87 = vpack.c.bf16 %v54, %v51
  %v88 = vpack.c.bf16 %v55, %v52
  %v89 = vpack.c.bf16 %v56, %v53
  %v90 = vpack.c.bf16 %v60, %v57
  %v91 = vpack.c.bf16 %v61, %v58
  %v92 = vpack.c.bf16 %v62, %v59
  %v93 = vpack.c.bf16 %v66, %v63
  %v94 = vpack.c.bf16 %v67, %v64
  %v95 = vpack.c.bf16 %v68, %v65
  %v96 = vpack.c.bf16 %v72, %v69
  %v97 = vpack.c.bf16 %v73, %v70
  %v98 = vpack.c.bf16 %v74, %v71
  %v99 = vld [vmem:[%s1] sm:$0xf]
  %v100 = vld [vmem:[%s1 + $0x4] sm:$0xf]
  %v101 = vld [vmem:[%s1 + $0x8] sm:$0xf]
  %v102 = vld [vmem:[%s1 + $0xc] sm:$0xf]
  %v103 = vld [vmem:[%s1 + $0x10] sm:$0xf]
  %v104 = vld [vmem:[%s1 + $0x14] sm:$0xf]
  %v105 = vld [vmem:[%s1 + $0x18] sm:$0xf]
  %v106 = vld [vmem:[%s1 + $0x1c] sm:$0xf]
  %v107 = vld [vmem:[%s1 + $0x20] sm:$0xf]
  %v108 = vld [vmem:[%s1 + $0x24] sm:$0xf]
  %v109 = vld [vmem:[%s1 + $0x28] sm:$0xf]
  %v110 = vld [vmem:[%s1 + $0x2c] sm:$0xf]
  %v111 = vld [vmem:[%s1 + $0x30] sm:$0xf]
  %v112 = vld [vmem:[%s1 + $0x34] sm:$0xf]
  %v113 = vld [vmem:[%s1 + $0x38] sm:$0xf]
  %v114 = vld [vmem:[%s1 + $0x3c] sm:$0xf]
  %v115 = vld [vmem:[%s1 + $0x40] sm:$0xf]
  %v116 = vld [vmem:[%s1 + $0x44] sm:$0xf]
  %v117 = vld [vmem:[%s1 + $0x48] sm:$0xf]
  %v118 = vld [vmem:[%s1 + $0x4c] sm:$0xf]
  %v119 = vld [vmem:[%s1 + $0x50] sm:$0xf]
  %v120 = vld [vmem:[%s1 + $0x54] sm:$0xf]
  %v121 = vld [vmem:[%s1 + $0x58] sm:$0xf]
  %v122 = vld [vmem:[%s1 + $0x5c] sm:$0xf]
  %v123 = vld [vmem:[%s1 + $0x60] sm:$0xf]
  %v124 = vld [vmem:[%s1 + $0x64] sm:$0xf]
  %v125 = vld [vmem:[%s1 + $0x68] sm:$0xf]
  %v126 = vld [vmem:[%s1 + $0x6c] sm:$0xf]
  %v127 = vld [vmem:[%s1 + $0x70] sm:$0xf]
  %v128 = vld [vmem:[%s1 + $0x74] sm:$0xf]
  %v129 = vld [vmem:[%s1 + $0x78] sm:$0xf]
  %v130 = vld [vmem:[%s1 + $0x7c] sm:$0xf]
  %v131 = vld [vmem:[%s1 + $0x80] sm:$0xf]
  %v132 = vld [vmem:[%s1 + $0x84] sm:$0xf]
  %v133 = vld [vmem:[%s1 + $0x88] sm:$0xf]
  %v134 = vld [vmem:[%s1 + $0x8c] sm:$0xf]
  %v135 = vld [vmem:[%s1 + $0x90] sm:$0xf]
  %v136 = vld [vmem:[%s1 + $0x94] sm:$0xf]
  %v137 = vld [vmem:[%s1 + $0x98] sm:$0xf]
  %v138 = vld [vmem:[%s1 + $0x9c] sm:$0xf]
  %v139 = vld [vmem:[%s1 + $0xa0] sm:$0xf]
  %v140 = vld [vmem:[%s1 + $0xa4] sm:$0xf]
  %v141 = vld [vmem:[%s1 + $0xa8] sm:$0xf]
  %v142 = vld [vmem:[%s1 + $0xac] sm:$0xf]
  %v143 = vld [vmem:[%s1 + $0xb0] sm:$0xf]
  %v144 = vld [vmem:[%s1 + $0xb4] sm:$0xf]
  %v145 = vld [vmem:[%s1 + $0xb8] sm:$0xf]
  %v146 = vld [vmem:[%s1 + $0xbc] sm:$0xf]
  %v147 = vld [vmem:[%s2] sm:$0x1]
  %v149 = vperm.slane %v147, 0
  %v199 = vunpack.c.l.b16 %v99
  %v200 = vunpack.c.l.b16 %v100
  %v201 = vunpack.c.l.b16 %v101
  %v202 = vunpack.c.l.b16 %v102
  %v203 = vunpack.c.l.b16 %v103
  %v204 = vunpack.c.l.b16 %v104
  %v205 = vunpack.c.l.b16 %v105
  %v206 = vunpack.c.l.b16 %v106
  %v207 = vunpack.c.l.b16 %v107
  %v208 = vunpack.c.l.b16 %v108
  %v209 = vunpack.c.l.b16 %v109
  %v210 = vunpack.c.l.b16 %v110
  %v211 = vunpack.c.l.b16 %v111
  %v212 = vunpack.c.l.b16 %v112
  %v213 = vunpack.c.l.b16 %v113
  %v214 = vunpack.c.l.b16 %v114
  %v215 = vunpack.c.l.b16 %v115
  %v216 = vunpack.c.l.b16 %v116
  %v217 = vunpack.c.l.b16 %v117
  %v218 = vunpack.c.l.b16 %v118
  %v219 = vunpack.c.l.b16 %v119
  %v220 = vunpack.c.l.b16 %v120
  %v221 = vunpack.c.l.b16 %v121
  %v222 = vunpack.c.l.b16 %v122
  %v223 = vunpack.c.l.b16 %v123
  %v224 = vunpack.c.l.b16 %v124
  %v225 = vunpack.c.l.b16 %v125
  %v226 = vunpack.c.l.b16 %v126
  %v227 = vunpack.c.l.b16 %v127
  %v228 = vunpack.c.l.b16 %v128
  %v229 = vunpack.c.l.b16 %v129
  %v230 = vunpack.c.l.b16 %v130
  %v231 = vunpack.c.l.b16 %v131
  %v232 = vunpack.c.l.b16 %v132
  %v233 = vunpack.c.l.b16 %v133
  %v234 = vunpack.c.l.b16 %v134
  %v235 = vunpack.c.l.b16 %v135
  %v236 = vunpack.c.l.b16 %v136
  %v237 = vunpack.c.l.b16 %v137
  %v238 = vunpack.c.l.b16 %v138
  %v239 = vunpack.c.l.b16 %v139
  %v240 = vunpack.c.l.b16 %v140
  %v241 = vunpack.c.l.b16 %v141
  %v242 = vunpack.c.l.b16 %v142
  %v243 = vunpack.c.l.b16 %v143
  %v244 = vunpack.c.l.b16 %v144
  %v245 = vunpack.c.l.b16 %v145
  %v246 = vunpack.c.l.b16 %v146
  %v247 = vpack.c.b16 %v200, %v199
  %v248 = vpack.c.b16 %v202, %v201
  %v249 = vpack.c.b16 %v204, %v203
  %v250 = vpack.c.b16 %v206, %v205
  %v251 = vpack.c.b16 %v208, %v207
  %v252 = vpack.c.b16 %v210, %v209
  %v253 = vpack.c.b16 %v212, %v211
  %v254 = vpack.c.b16 %v214, %v213
  %v255 = vpack.c.b16 %v216, %v215
  %v256 = vpack.c.b16 %v218, %v217
  %v257 = vpack.c.b16 %v220, %v219
  %v258 = vpack.c.b16 %v222, %v221
  %v259 = vpack.c.b16 %v224, %v223
  %v260 = vpack.c.b16 %v226, %v225
  %v261 = vpack.c.b16 %v228, %v227
  %v262 = vpack.c.b16 %v230, %v229
  %v263 = vpack.c.b16 %v232, %v231
  %v264 = vpack.c.b16 %v234, %v233
  %v265 = vpack.c.b16 %v236, %v235
  %v266 = vpack.c.b16 %v238, %v237
  %v267 = vpack.c.b16 %v240, %v239
  %v268 = vpack.c.b16 %v242, %v241
  %v269 = vpack.c.b16 %v244, %v243
  %v270 = vpack.c.b16 %v246, %v245
  %295 = vmatpush.bf16.msra.mxu0 %v254
  %296 = vmatpush.bf16.msra.mxu0 %v253
  %297 = vmatpush.bf16.msra.mxu0 %v252
  %298 = vmatpush.bf16.msra.mxu0 %v251
  %299 = vmatpush.bf16.msra.mxu0 %v250
  %300 = vmatpush.bf16.msra.mxu0 %v249
  %301 = vmatpush.bf16.msra.mxu0 %v248
  %302 = vmatpush.bf16.msra.mxu0 %v247
  %303 = vmatmul.bf16.gmra.mxu0 %v75
  %v304 = vpop.f32.mrf.mxu0
  %v305 = vadd.f32 %v149, %v304
  %v306 = vpop.f32.mrf.mxu0
  %v307 = vadd.f32 %v149, %v306
  %308 = vmatmul.bf16.gmra.mxu0 %v78
  %v309 = vpop.f32.mrf.mxu0
  %v310 = vadd.f32 %v149, %v309
  %v311 = vpop.f32.mrf.mxu0
  %v312 = vadd.f32 %v149, %v311
  %313 = vmatmul.bf16.gmra.mxu0 %v81
  %v314 = vpop.f32.mrf.mxu0
  %v315 = vadd.f32 %v149, %v314
  %v316 = vpop.f32.mrf.mxu0
  %v317 = vadd.f32 %v149, %v316
  %318 = vmatmul.bf16.gmra.mxu0 %v84
  %v319 = vpop.f32.mrf.mxu0
  %v320 = vadd.f32 %v149, %v319
  %v321 = vpop.f32.mrf.mxu0
  %v322 = vadd.f32 %v149, %v321
  %323 = vmatmul.bf16.gmra.mxu0 %v87
  %v324 = vpop.f32.mrf.mxu0
  %v325 = vadd.f32 %v149, %v324
  %v326 = vpop.f32.mrf.mxu0
  %v327 = vadd.f32 %v149, %v326
  %328 = vmatmul.bf16.gmra.mxu0 %v90
  %v329 = vpop.f32.mrf.mxu0
  %v330 = vadd.f32 %v149, %v329
  %v331 = vpop.f32.mrf.mxu0
  %v332 = vadd.f32 %v149, %v331
  %333 = vmatmul.bf16.gmra.mxu0 %v93
  %v334 = vpop.f32.mrf.mxu0
  %v335 = vadd.f32 %v149, %v334
  %v336 = vpop.f32.mrf.mxu0
  %v337 = vadd.f32 %v149, %v336
  %338 = vmatmul.bf16.gmra.mxu0 %v96
  %v339 = vpop.f32.mrf.mxu0
  %v340 = vadd.f32 %v149, %v339
  %v341 = vpop.f32.mrf.mxu0
  %v342 = vadd.f32 %v149, %v341
  %343 = vdwg.mxu0
  %344 = vmatpush.bf16.msra.mxu0 %v262
  %345 = vmatpush.bf16.msra.mxu0 %v261
  %346 = vmatpush.bf16.msra.mxu0 %v260
  %347 = vmatpush.bf16.msra.mxu0 %v259
  %348 = vmatpush.bf16.msra.mxu0 %v258
  %349 = vmatpush.bf16.msra.mxu0 %v257
  %350 = vmatpush.bf16.msra.mxu0 %v256
  %351 = vmatpush.bf16.msra.mxu0 %v255
  %352 = vmatmul.bf16.gmra.mxu0 %v76
  %v353 = vpop.f32.mrf.mxu0
  %v354 = vadd.f32 %v305, %v353
  %v355 = vpop.f32.mrf.mxu0
  %v356 = vadd.f32 %v307, %v355
  %357 = vmatmul.bf16.gmra.mxu0 %v79
  %v358 = vpop.f32.mrf.mxu0
  %v359 = vadd.f32 %v310, %v358
  %v360 = vpop.f32.mrf.mxu0
  %v361 = vadd.f32 %v312, %v360
  %362 = vmatmul.bf16.gmra.mxu0 %v82
  %v363 = vpop.f32.mrf.mxu0
  %v364 = vadd.f32 %v315, %v363
  %v365 = vpop.f32.mrf.mxu0
  %v366 = vadd.f32 %v317, %v365
  %367 = vmatmul.bf16.gmra.mxu0 %v85
  %v368 = vpop.f32.mrf.mxu0
  %v369 = vadd.f32 %v320, %v368
  %v370 = vpop.f32.mrf.mxu0
  %v371 = vadd.f32 %v322, %v370
  %372 = vmatmul.bf16.gmra.mxu0 %v88
  %v373 = vpop.f32.mrf.mxu0
  %v374 = vadd.f32 %v325, %v373
  %v375 = vpop.f32.mrf.mxu0
  %v376 = vadd.f32 %v327, %v375
  %377 = vmatmul.bf16.gmra.mxu0 %v91
  %v378 = vpop.f32.mrf.mxu0
  %v379 = vadd.f32 %v330, %v378
  %v380 = vpop.f32.mrf.mxu0
  %v381 = vadd.f32 %v332, %v380
  %382 = vmatmul.bf16.gmra.mxu0 %v94
  %v383 = vpop.f32.mrf.mxu0
  %v384 = vadd.f32 %v335, %v383
  %v385 = vpop.f32.mrf.mxu0
  %v386 = vadd.f32 %v337, %v385
  %387 = vmatmul.bf16.gmra.mxu0 %v97
  %v388 = vpop.f32.mrf.mxu0
  %v389 = vadd.f32 %v340, %v388
  %v390 = vpop.f32.mrf.mxu0
  %v391 = vadd.f32 %v342, %v390
  %392 = vdwg.mxu0
  %393 = vmatpush.bf16.msra.mxu0 %v270
  %394 = vmatpush.bf16.msra.mxu0 %v269
  %395 = vmatpush.bf16.msra.mxu0 %v268
  %396 = vmatpush.bf16.msra.mxu0 %v267
  %397 = vmatpush.bf16.msra.mxu0 %v266
  %398 = vmatpush.bf16.msra.mxu0 %v265
  %399 = vmatpush.bf16.msra.mxu0 %v264
  %400 = vmatpush.bf16.msra.mxu0 %v263
  %401 = vmatmul.bf16.gmra.mxu0 %v77
  %v402 = vpop.f32.mrf.mxu0
  %v403 = vadd.f32 %v354, %v402
  %v404 = vpop.f32.mrf.mxu0
  %v405 = vadd.f32 %v356, %v404
  %406 = vmatmul.bf16.gmra.mxu0 %v80
  %v407 = vpop.f32.mrf.mxu0
  %v408 = vadd.f32 %v359, %v407
  %v409 = vpop.f32.mrf.mxu0
  %v410 = vadd.f32 %v361, %v409
  %411 = vmatmul.bf16.gmra.mxu0 %v83
  %v412 = vpop.f32.mrf.mxu0
  %v413 = vadd.f32 %v364, %v412
  %v414 = vpop.f32.mrf.mxu0
  %v415 = vadd.f32 %v366, %v414
  %416 = vmatmul.bf16.gmra.mxu0 %v86
  %v417 = vpop.f32.mrf.mxu0
  %v418 = vadd.f32 %v369, %v417
  %v419 = vpop.f32.mrf.mxu0
  %v420 = vadd.f32 %v371, %v419
  %421 = vmatmul.bf16.gmra.mxu0 %v89
  %v422 = vpop.f32.mrf.mxu0
  %v423 = vadd.f32 %v374, %v422
  %v424 = vpop.f32.mrf.mxu0
  %v425 = vadd.f32 %v376, %v424
  %426 = vmatmul.bf16.gmra.mxu0 %v92
  %v427 = vpop.f32.mrf.mxu0
  %v428 = vadd.f32 %v379, %v427
  %v429 = vpop.f32.mrf.mxu0
  %v430 = vadd.f32 %v381, %v429
  %431 = vmatmul.bf16.gmra.mxu0 %v95
  %v432 = vpop.f32.mrf.mxu0
  %v433 = vadd.f32 %v384, %v432
  %v434 = vpop.f32.mrf.mxu0
  %v435 = vadd.f32 %v386, %v434
  %436 = vmatmul.bf16.gmra.mxu0 %v98
  %v437 = vpop.f32.mrf.mxu0
  %v438 = vadd.f32 %v389, %v437
  %v439 = vpop.f32.mrf.mxu0
  %v440 = vadd.f32 %v391, %v439
  %441 = vdwg.mxu0
  %v442 = vmax.f32 %v403, 0.0
  %v443 = vmax.f32 %v405, 0.0
  %v444 = vmax.f32 %v408, 0.0
  %v445 = vmax.f32 %v410, 0.0
  %v446 = vmax.f32 %v413, 0.0
  %v447 = vmax.f32 %v415, 0.0
  %v448 = vmax.f32 %v418, 0.0
  %v449 = vmax.f32 %v420, 0.0
  %v450 = vmax.f32 %v423, 0.0
  %v451 = vmax.f32 %v425, 0.0
  %v452 = vmax.f32 %v428, 0.0
  %v453 = vmax.f32 %v430, 0.0
  %v454 = vmax.f32 %v433, 0.0
  %v455 = vmax.f32 %v435, 0.0
  %v456 = vmax.f32 %v438, 0.0
  %v457 = vmax.f32 %v440, 0.0
  %v458 = vpack.c.bf16 %v443, %v442
  %v459 = vpack.c.bf16 %v445, %v444
  %v460 = vpack.c.bf16 %v447, %v446
  %v461 = vpack.c.bf16 %v449, %v448
  %v462 = vpack.c.bf16 %v451, %v450
  %v463 = vpack.c.bf16 %v453, %v452
  %v464 = vpack.c.bf16 %v455, %v454
  %v465 = vpack.c.bf16 %v457, %v456
  %v466 = vld [vmem:[%s3] sm:$0xf]
  %v467 = vld [vmem:[%s3 + $0x4] sm:$0xf]
  %v468 = vld [vmem:[%s3 + $0x8] sm:$0xf]
  %v469 = vld [vmem:[%s3 + $0xc] sm:$0xf]
  %v470 = vld [vmem:[%s3 + $0x10] sm:$0xf]
  %v471 = vld [vmem:[%s3 + $0x14] sm:$0xf]
  %v472 = vld [vmem:[%s3 + $0x18] sm:$0xf]
  %v473 = vld [vmem:[%s3 + $0x1c] sm:$0xf]
  %v474 = vld [vmem:[%s4] sm:$0x1]
  %v476 = vperm.slane %v474, 0
  %v486 = vunpack.c.l.b16 %v466
  %v487 = vunpack.c.l.b16 %v467
  %v488 = vunpack.c.l.b16 %v468
  %v489 = vunpack.c.l.b16 %v469
  %v490 = vunpack.c.l.b16 %v470
  %v491 = vunpack.c.l.b16 %v471
  %v492 = vunpack.c.l.b16 %v472
  %v493 = vunpack.c.l.b16 %v473
  %v494 = vpack.c.b16 %v487, %v486
  %v495 = vpack.c.b16 %v489, %v488
  %v496 = vpack.c.b16 %v491, %v490
  %v497 = vpack.c.b16 %v493, %v492
  %vm502 = vcmask 523264
  %v504 = vsel %vm502, %v458, 0
  %v507 = vsel %vm502, %v459, 0
  %v510 = vsel %vm502, %v460, 0
  %v513 = vsel %vm502, %v461, 0
  %v516 = vsel %vm502, %v462, 0
  %v519 = vsel %vm502, %v463, 0
  %v522 = vsel %vm502, %v464, 0
  %v525 = vsel %vm502, %v465, 0
  %527 = vmatpush.bf16.msra.mxu0 0
  %528 = vmatpush.bf16.msra.mxu0 0
  %529 = vmatpush.bf16.msra.mxu0 0
  %530 = vmatpush.bf16.msra.mxu0 0
  %531 = vmatpush.bf16.msra.mxu0 %v497
  %532 = vmatpush.bf16.msra.mxu0 %v496
  %533 = vmatpush.bf16.msra.mxu0 %v495
  %534 = vmatpush.bf16.msra.mxu0 %v494
  %535 = vmatmul.bf16.gmra.mxu0 %v504
  %v536 = vpop.f32.mrf.mxu0
  %v537 = vadd.f32 %v476, %v536
  %v538 = vpop.f32.mrf.mxu0
  %v539 = vadd.f32 %v476, %v538
  %540 = vmatmul.bf16.gmra.mxu0 %v507
  %v541 = vpop.f32.mrf.mxu0
  %v542 = vadd.f32 %v476, %v541
  %v543 = vpop.f32.mrf.mxu0
  %v544 = vadd.f32 %v476, %v543
  %545 = vmatmul.bf16.gmra.mxu0 %v510
  %v546 = vpop.f32.mrf.mxu0
  %v547 = vadd.f32 %v476, %v546
  %v548 = vpop.f32.mrf.mxu0
  %v549 = vadd.f32 %v476, %v548
  %550 = vmatmul.bf16.gmra.mxu0 %v513
  %v551 = vpop.f32.mrf.mxu0
  %v552 = vadd.f32 %v476, %v551
  %v553 = vpop.f32.mrf.mxu0
  %v554 = vadd.f32 %v476, %v553
  %555 = vmatmul.bf16.gmra.mxu0 %v516
  %v556 = vpop.f32.mrf.mxu0
  %v557 = vadd.f32 %v476, %v556
  %v558 = vpop.f32.mrf.mxu0
  %v559 = vadd.f32 %v476, %v558
  %560 = vmatmul.bf16.gmra.mxu0 %v519
  %v561 = vpop.f32.mrf.mxu0
  %v562 = vadd.f32 %v476, %v561
  %v563 = vpop.f32.mrf.mxu0
  %v564 = vadd.f32 %v476, %v563
  %565 = vmatmul.bf16.gmra.mxu0 %v522
  %v566 = vpop.f32.mrf.mxu0
  %v567 = vadd.f32 %v476, %v566
  %v568 = vpop.f32.mrf.mxu0
  %v569 = vadd.f32 %v476, %v568
  %570 = vmatmul.bf16.gmra.mxu0 %v525
  %v571 = vpop.f32.mrf.mxu0
  %v572 = vadd.f32 %v476, %v571
  %v573 = vpop.f32.mrf.mxu0
  %v574 = vadd.f32 %v476, %v573
  %575 = vdwg.mxu0
  %v576 = vmax.f32 %v537, 0.0
  %v577 = vmax.f32 %v539, 0.0
  %v578 = vmax.f32 %v542, 0.0
  %v579 = vmax.f32 %v544, 0.0
  %v580 = vmax.f32 %v547, 0.0
  %v581 = vmax.f32 %v549, 0.0
  %v582 = vmax.f32 %v552, 0.0
  %v583 = vmax.f32 %v554, 0.0
  %v584 = vmax.f32 %v557, 0.0
  %v585 = vmax.f32 %v559, 0.0
  %v586 = vmax.f32 %v562, 0.0
  %v587 = vmax.f32 %v564, 0.0
  %v588 = vmax.f32 %v567, 0.0
  %v589 = vmax.f32 %v569, 0.0
  %v590 = vmax.f32 %v572, 0.0
  %v591 = vmax.f32 %v574, 0.0
  %v592 = vpack.c.bf16 %v577, %v576
  %v593 = vpack.c.bf16 %v579, %v578
  %v594 = vpack.c.bf16 %v581, %v580
  %v595 = vpack.c.bf16 %v583, %v582
  %v596 = vpack.c.bf16 %v585, %v584
  %v597 = vpack.c.bf16 %v587, %v586
  %v598 = vpack.c.bf16 %v589, %v588
  %v599 = vpack.c.bf16 %v591, %v590
  %v600 = vld [vmem:[%s5] sm:$0xff]
  %v601 = vld [vmem:[%s5 + $0x8] sm:$0xf]
  %v602 = vld [vmem:[%s5 + $0xc] sm:$0xff]
  %v603 = vld [vmem:[%s5 + $0x14] sm:$0xf]
  %v604 = vld [vmem:[%s5 + $0x18] sm:$0xff]
  %v605 = vld [vmem:[%s5 + $0x20] sm:$0xf]
  %v606 = vld [vmem:[%s5 + $0x24] sm:$0xff]
  %v607 = vld [vmem:[%s5 + $0x2c] sm:$0xf]
  %v608 = vld [vmem:[%s5 + $0x30] sm:$0xff]
  %v609 = vld [vmem:[%s5 + $0x38] sm:$0xf]
  %v610 = vld [vmem:[%s5 + $0x3c] sm:$0xff]
  %v611 = vld [vmem:[%s5 + $0x44] sm:$0xf]
  %v612 = vld [vmem:[%s5 + $0x48] sm:$0xff]
  %v613 = vld [vmem:[%s5 + $0x50] sm:$0xf]
  %v614 = vld [vmem:[%s5 + $0x54] sm:$0xff]
  %v615 = vld [vmem:[%s5 + $0x5c] sm:$0xf]
  %v616 = vld [vmem:[%s6] sm:$0x7]
  %v618 = vperm.slane %v616, 0
  %v619 = vperm.slane %v616, 1
  %v620 = vperm.slane %v616, 2
  %v640 = vunpack.c.l.b16 %v600
  %v641 = vunpack.c.h.b16 %v600
  %v642 = vunpack.c.l.b16 %v601
  %v643 = vunpack.c.l.b16 %v602
  %v644 = vunpack.c.h.b16 %v602
  %v645 = vunpack.c.l.b16 %v603
  %v646 = vunpack.c.l.b16 %v604
  %v647 = vunpack.c.h.b16 %v604
  %v648 = vunpack.c.l.b16 %v605
  %v649 = vunpack.c.l.b16 %v606
  %v650 = vunpack.c.h.b16 %v606
  %v651 = vunpack.c.l.b16 %v607
  %v652 = vunpack.c.l.b16 %v608
  %v653 = vunpack.c.h.b16 %v608
  %v654 = vunpack.c.l.b16 %v609
  %v655 = vunpack.c.l.b16 %v610
  %v656 = vunpack.c.h.b16 %v610
  %v657 = vunpack.c.l.b16 %v611
  %v658 = vunpack.c.l.b16 %v612
  %v659 = vunpack.c.h.b16 %v612
  %v660 = vunpack.c.l.b16 %v613
  %v661 = vunpack.c.l.b16 %v614
  %v662 = vunpack.c.h.b16 %v614
  %v663 = vunpack.c.l.b16 %v615
  %v664 = vpack.c.b16 %v643, %v640
  %v665 = vpack.c.b16 %v644, %v641
  %v666 = vpack.c.b16 %v645, %v642
  %v667 = vpack.c.b16 %v649, %v646
  %v668 = vpack.c.b16 %v650, %v647
  %v669 = vpack.c.b16 %v651, %v648
  %v670 = vpack.c.b16 %v655, %v652
  %v671 = vpack.c.b16 %v656, %v653
  %v672 = vpack.c.b16 %v657, %v654
  %v673 = vpack.c.b16 %v661, %v658
  %v674 = vpack.c.b16 %v662, %v659
  %v675 = vpack.c.b16 %v663, %v660
  %v689 = vsel %vm502, %v592, 0
  %v692 = vsel %vm502, %v593, 0
  %v695 = vsel %vm502, %v594, 0
  %v698 = vsel %vm502, %v595, 0
  %v701 = vsel %vm502, %v596, 0
  %v704 = vsel %vm502, %v597, 0
  %v707 = vsel %vm502, %v598, 0
  %v710 = vsel %vm502, %v599, 0
  %712 = vmatpush.bf16.msra.mxu0 0
  %713 = vmatpush.bf16.msra.mxu0 0
  %714 = vmatpush.bf16.msra.mxu0 0
  %715 = vmatpush.bf16.msra.mxu0 0
  %716 = vmatpush.bf16.msra.mxu0 %v673
  %717 = vmatpush.bf16.msra.mxu0 %v670
  %718 = vmatpush.bf16.msra.mxu0 %v667
  %719 = vmatpush.bf16.msra.mxu0 %v664
  %720 = vmatmul.bf16.gmra.mxu0 %v689
  %v721 = vpop.f32.mrf.mxu0
  %v722 = vadd.f32 %v618, %v721
  %v723 = vpop.f32.mrf.mxu0
  %v724 = vadd.f32 %v618, %v723
  %725 = vmatmul.bf16.gmra.mxu0 %v692
  %v726 = vpop.f32.mrf.mxu0
  %v727 = vadd.f32 %v618, %v726
  %v728 = vpop.f32.mrf.mxu0
  %v729 = vadd.f32 %v618, %v728
  %730 = vmatmul.bf16.gmra.mxu0 %v695
  %v731 = vpop.f32.mrf.mxu0
  %v732 = vadd.f32 %v618, %v731
  %v733 = vpop.f32.mrf.mxu0
  %v734 = vadd.f32 %v618, %v733
  %735 = vmatmul.bf16.gmra.mxu0 %v698
  %v736 = vpop.f32.mrf.mxu0
  %v737 = vadd.f32 %v618, %v736
  %v738 = vpop.f32.mrf.mxu0
  %v739 = vadd.f32 %v618, %v738
  %740 = vmatmul.bf16.gmra.mxu0 %v701
  %v741 = vpop.f32.mrf.mxu0
  %v742 = vadd.f32 %v618, %v741
  %v743 = vpop.f32.mrf.mxu0
  %v744 = vadd.f32 %v618, %v743
  %745 = vmatmul.bf16.gmra.mxu0 %v704
  %v746 = vpop.f32.mrf.mxu0
  %v747 = vadd.f32 %v618, %v746
  %v748 = vpop.f32.mrf.mxu0
  %v749 = vadd.f32 %v618, %v748
  %750 = vmatmul.bf16.gmra.mxu0 %v707
  %v751 = vpop.f32.mrf.mxu0
  %v752 = vadd.f32 %v618, %v751
  %v753 = vpop.f32.mrf.mxu0
  %v754 = vadd.f32 %v618, %v753
  %755 = vmatmul.bf16.gmra.mxu0 %v710
  %v756 = vpop.f32.mrf.mxu0
  %v757 = vadd.f32 %v618, %v756
  %v758 = vpop.f32.mrf.mxu0
  %v759 = vadd.f32 %v618, %v758
  %760 = vdwg.mxu0
  %761 = vmatpush.bf16.msra.mxu0 0
  %762 = vmatpush.bf16.msra.mxu0 0
  %763 = vmatpush.bf16.msra.mxu0 0
  %764 = vmatpush.bf16.msra.mxu0 0
  %765 = vmatpush.bf16.msra.mxu0 %v674
  %766 = vmatpush.bf16.msra.mxu0 %v671
  %767 = vmatpush.bf16.msra.mxu0 %v668
  %768 = vmatpush.bf16.msra.mxu0 %v665
  %769 = vmatmul.bf16.gmra.mxu0 %v689
  %v770 = vpop.f32.mrf.mxu0
  %v771 = vadd.f32 %v619, %v770
  %v772 = vpop.f32.mrf.mxu0
  %v773 = vadd.f32 %v619, %v772
  %774 = vmatmul.bf16.gmra.mxu0 %v692
  %v775 = vpop.f32.mrf.mxu0
  %v776 = vadd.f32 %v619, %v775
  %v777 = vpop.f32.mrf.mxu0
  %v778 = vadd.f32 %v619, %v777
  %779 = vmatmul.bf16.gmra.mxu0 %v695
  %v780 = vpop.f32.mrf.mxu0
  %v781 = vadd.f32 %v619, %v780
  %v782 = vpop.f32.mrf.mxu0
  %v783 = vadd.f32 %v619, %v782
  %784 = vmatmul.bf16.gmra.mxu0 %v698
  %v785 = vpop.f32.mrf.mxu0
  %v786 = vadd.f32 %v619, %v785
  %v787 = vpop.f32.mrf.mxu0
  %v788 = vadd.f32 %v619, %v787
  %789 = vmatmul.bf16.gmra.mxu0 %v701
  %v790 = vpop.f32.mrf.mxu0
  %v791 = vadd.f32 %v619, %v790
  %v792 = vpop.f32.mrf.mxu0
  %v793 = vadd.f32 %v619, %v792
  %794 = vmatmul.bf16.gmra.mxu0 %v704
  %v795 = vpop.f32.mrf.mxu0
  %v796 = vadd.f32 %v619, %v795
  %v797 = vpop.f32.mrf.mxu0
  %v798 = vadd.f32 %v619, %v797
  %799 = vmatmul.bf16.gmra.mxu0 %v707
  %v800 = vpop.f32.mrf.mxu0
  %v801 = vadd.f32 %v619, %v800
  %v802 = vpop.f32.mrf.mxu0
  %v803 = vadd.f32 %v619, %v802
  %804 = vmatmul.bf16.gmra.mxu0 %v710
  %v805 = vpop.f32.mrf.mxu0
  %v806 = vadd.f32 %v619, %v805
  %v807 = vpop.f32.mrf.mxu0
  %v808 = vadd.f32 %v619, %v807
  %809 = vdwg.mxu0
  %810 = vmatpush.bf16.msra.mxu0 0
  %811 = vmatpush.bf16.msra.mxu0 0
  %812 = vmatpush.bf16.msra.mxu0 0
  %813 = vmatpush.bf16.msra.mxu0 0
  %814 = vmatpush.bf16.msra.mxu0 %v675
  %815 = vmatpush.bf16.msra.mxu0 %v672
  %816 = vmatpush.bf16.msra.mxu0 %v669
  %817 = vmatpush.bf16.msra.mxu0 %v666
  %818 = vmatmul.bf16.gmra.mxu0 %v689
  %v819 = vpop.f32.mrf.mxu0
  %v820 = vadd.f32 %v620, %v819
  %v821 = vpop.f32.mrf.mxu0
  %v822 = vadd.f32 %v620, %v821
  %823 = vmatmul.bf16.gmra.mxu0 %v692
  %v824 = vpop.f32.mrf.mxu0
  %v825 = vadd.f32 %v620, %v824
  %v826 = vpop.f32.mrf.mxu0
  %v827 = vadd.f32 %v620, %v826
  %828 = vmatmul.bf16.gmra.mxu0 %v695
  %v829 = vpop.f32.mrf.mxu0
  %v830 = vadd.f32 %v620, %v829
  %v831 = vpop.f32.mrf.mxu0
  %v832 = vadd.f32 %v620, %v831
  %833 = vmatmul.bf16.gmra.mxu0 %v698
  %v834 = vpop.f32.mrf.mxu0
  %v835 = vadd.f32 %v620, %v834
  %v836 = vpop.f32.mrf.mxu0
  %v837 = vadd.f32 %v620, %v836
  %838 = vmatmul.bf16.gmra.mxu0 %v701
  %v839 = vpop.f32.mrf.mxu0
  %v840 = vadd.f32 %v620, %v839
  %v841 = vpop.f32.mrf.mxu0
  %v842 = vadd.f32 %v620, %v841
  %843 = vmatmul.bf16.gmra.mxu0 %v704
  %v844 = vpop.f32.mrf.mxu0
  %v845 = vadd.f32 %v620, %v844
  %v846 = vpop.f32.mrf.mxu0
  %v847 = vadd.f32 %v620, %v846
  %848 = vmatmul.bf16.gmra.mxu0 %v707
  %v849 = vpop.f32.mrf.mxu0
  %v850 = vadd.f32 %v620, %v849
  %v851 = vpop.f32.mrf.mxu0
  %v852 = vadd.f32 %v620, %v851
  %853 = vmatmul.bf16.gmra.mxu0 %v710
  %v854 = vpop.f32.mrf.mxu0
  %v855 = vadd.f32 %v620, %v854
  %v856 = vpop.f32.mrf.mxu0
  %v857 = vadd.f32 %v620, %v856
  %858 = vdwg.mxu0
  %859 = vst [vmem:[%s7] sm:$0xff] %v722
  %860 = vst [vmem:[%s7 + $0x8] sm:$0xff] %v771
  %861 = vst [vmem:[%s7 + $0x10] sm:$0xff] %v820
  %862 = vst [vmem:[%s7 + $0x18] sm:$0xff] %v724
  %863 = vst [vmem:[%s7 + $0x20] sm:$0xff] %v773
  %864 = vst [vmem:[%s7 + $0x28] sm:$0xff] %v822
  %865 = vst [vmem:[%s7 + $0x30] sm:$0xff] %v727
  %866 = vst [vmem:[%s7 + $0x38] sm:$0xff] %v776
  %867 = vst [vmem:[%s7 + $0x40] sm:$0xff] %v825
  %868 = vst [vmem:[%s7 + $0x48] sm:$0xff] %v729
  %869 = vst [vmem:[%s7 + $0x50] sm:$0xff] %v778
  %870 = vst [vmem:[%s7 + $0x58] sm:$0xff] %v827
  %871 = vst [vmem:[%s7 + $0x60] sm:$0xff] %v732
  %872 = vst [vmem:[%s7 + $0x68] sm:$0xff] %v781
  %873 = vst [vmem:[%s7 + $0x70] sm:$0xff] %v830
  %874 = vst [vmem:[%s7 + $0x78] sm:$0xff] %v734
  %875 = vst [vmem:[%s7 + $0x80] sm:$0xff] %v783
  %876 = vst [vmem:[%s7 + $0x88] sm:$0xff] %v832
  %877 = vst [vmem:[%s7 + $0x90] sm:$0xff] %v737
  %878 = vst [vmem:[%s7 + $0x98] sm:$0xff] %v786
  %879 = vst [vmem:[%s7 + $0xa0] sm:$0xff] %v835
  %880 = vst [vmem:[%s7 + $0xa8] sm:$0xff] %v739
  %881 = vst [vmem:[%s7 + $0xb0] sm:$0xff] %v788
  %882 = vst [vmem:[%s7 + $0xb8] sm:$0xff] %v837
  %883 = vst [vmem:[%s7 + $0xc0] sm:$0xff] %v742
  %884 = vst [vmem:[%s7 + $0xc8] sm:$0xff] %v791
  %885 = vst [vmem:[%s7 + $0xd0] sm:$0xff] %v840
  %886 = vst [vmem:[%s7 + $0xd8] sm:$0xff] %v744
  %887 = vst [vmem:[%s7 + $0xe0] sm:$0xff] %v793
  %888 = vst [vmem:[%s7 + $0xe8] sm:$0xff] %v842
  %889 = vst [vmem:[%s7 + $0xf0] sm:$0xff] %v747
  %890 = vst [vmem:[%s7 + $0xf8] sm:$0xff] %v796
  %891 = vst [vmem:[%s7 + $0x100] sm:$0xff] %v845
  %892 = vst [vmem:[%s7 + $0x108] sm:$0xff] %v749
  %893 = vst [vmem:[%s7 + $0x110] sm:$0xff] %v798
  %894 = vst [vmem:[%s7 + $0x118] sm:$0xff] %v847
  %895 = vst [vmem:[%s7 + $0x120] sm:$0xff] %v752
  %896 = vst [vmem:[%s7 + $0x128] sm:$0xff] %v801
  %897 = vst [vmem:[%s7 + $0x130] sm:$0xff] %v850
  %898 = vst [vmem:[%s7 + $0x138] sm:$0xff] %v754
  %899 = vst [vmem:[%s7 + $0x140] sm:$0xff] %v803
  %900 = vst [vmem:[%s7 + $0x148] sm:$0xff] %v852
  %901 = vst [vmem:[%s7 + $0x150] sm:$0xff] %v757
  %902 = vst [vmem:[%s7 + $0x158] sm:$0xff] %v806
  %903 = vst [vmem:[%s7 + $0x160] sm:$0xff] %v855
  %904 = vst [vmem:[%s7 + $0x168] sm:$0xff] %v759
  %905 = vst [vmem:[%s7 + $0x170] sm:$0xff] %v808
  %906 = vst [vmem:[%s7 + $0x178] sm:$0xff] %v857
  // Predicated region
  $region30: #{simple_autoencoder_forward.1} parent=0 // pred_check
    _
  $region31: #{simple_autoencoder_forward.1} parent=0 // pred_check_branch
    %908 = sbr.rel (0) target = $region33
  $region32: #{simple_autoencoder_forward.1} parent=0 // pred_region
    _
  $region33: #{simple_autoencoder_forward.1} parent=0 // pred_fallthru
    _
  // Predicated region
  $region34: #{simple_autoencoder_forward.1} parent=0 // pred_check
    _
  $region35: #{simple_autoencoder_forward.1} parent=0 // pred_check_branch
    %910 = sbr.rel (0) target = $region37
  $region36: #{simple_autoencoder_forward.1} parent=0 // pred_region
    _
  $region37: #{simple_autoencoder_forward.1} parent=0 // pred_fallthru
    _

</llo_original>
